<compile_context>
chip_gen: v6e
topology: v6e:2x2x1
jax: 0.10.0
libtpu: 0.0.40
codegen_flags: <defaults>
</compile_context>

<pallas_src>
import numpy as np
import jax
import jax.numpy as jnp
from jax.experimental import pallas as pl
from jax.experimental.pallas import tpu as pltpu

_F32_EPS = float(jnp.finfo(jnp.float32).eps)

_TARGET_BLOCK_ELEMS = 2048 * 512   # ~4 MiB f32 per stream per tile
_TINY_ELEMS = 64 * 512             # <= 128 KiB/stream -> single grid step
_VMEM_LIMIT = 32 * 1024 * 1024


def _ceil_div(a, b):
    return -(-a // b)


def _round_up(a, b):
    return _ceil_div(a, b) * b


def _tile_plan(n):
    """Pick (lane, rows, block_rows, grid_rows, pad) for a flat length-n stream."""
    lane = None
    for cand in (512, 256, 128):
        if n % cand == 0:
            lane = cand
            break
    pad = 0
    if lane is None:
        # Rare ragged length (not a multiple of 128): minimal pad fallback.
        lane = 128
        pad = (-n) % lane
    rows = (n + pad) // lane

    if rows * lane <= _TINY_ELEMS:
        block_rows = rows                          # single step, full-dim block
    else:
        row_block = _TARGET_BLOCK_ELEMS // lane    # multiple of 8
        if rows <= row_block:
            # ~4 grid steps so the pipeline can overlap DMA with compute.
            block_rows = min(rows, max(8, _round_up(_ceil_div(rows, 4), 8)))
        else:
            block_rows = row_block
    grid_rows = _ceil_div(rows, block_rows)
    return lane, rows, block_rows, grid_rows, pad


# --------------------------------------------------------------------------
# Kernels
# --------------------------------------------------------------------------

def _log_mixup_exp_kernel(ab_ref, x_ref, z_ref, o_ref):
    # ab_ref: SMEM (2,) f32 = [alpha, 1 - alpha] (scalar prefetch)
    a = ab_ref[0]
    b = ab_ref[1]
    ea = jnp.exp(x_ref[...].astype(jnp.float32))
    eb = jnp.exp(z_ref[...].astype(jnp.float32))
    # scale = 1.0 (reference overwrites the energy_scale result with 1.0)
    o_ref[...] = jnp.log(a * ea + b * eb + _F32_EPS)


def _log_exp_eps_kernel(x_ref, o_ref):
    # Passthrough region of the length-mismatch branch: log(exp(x) + eps).
    o_ref[...] = jnp.log(jnp.exp(x_ref[...].astype(jnp.float32)) + _F32_EPS)


# --------------------------------------------------------------------------
# Wrappers
# --------------------------------------------------------------------------

def log_mixup_exp_pallas(xa, xb, alpha):
    """Equal-shape log-mixup-exp.  xa, xb: same shape, any float dtype."""
    assert xa.shape == xb.shape, "only the equal-shape path uses this kernel"
    orig_shape = xa.shape
    n = int(np.prod(orig_shape))
    lane, rows, block_rows, grid_rows, pad = _tile_plan(n)

    xf = xa.reshape(-1)
    zf = xb.reshape(-1)
    if pad:
        # Rare ragged-length fallback only.
        xf = jnp.pad(xf, (0, pad))
        zf = jnp.pad(zf, (0, pad))
    x2d = xf.reshape(rows, lane)
    z2d = zf.reshape(rows, lane)

    ab = jnp.asarray([alpha, 1.0 - alpha], dtype=jnp.float32)

    total = rows * lane
    cost = pl.CostEstimate(
        flops=4 * total,
        transcendentals=3 * total,                 # 2x exp + 1x log / element
        bytes_accessed=total * (x2d.dtype.itemsize + z2d.dtype.itemsize + 4),
    )

    out2d = pl.pallas_call(
        _log_mixup_exp_kernel,
        out_shape=jax.ShapeDtypeStruct((rows, lane), jnp.float32),
        grid_spec=pltpu.PrefetchScalarGridSpec(
            num_scalar_prefetch=1,
            grid=(grid_rows,),
            in_specs=[
                pl.BlockSpec((block_rows, lane), lambda r, ab_ref: (r, 0)),
                pl.BlockSpec((block_rows, lane), lambda r, ab_ref: (r, 0)),
            ],
            out_specs=pl.BlockSpec((block_rows, lane), lambda r, ab_ref: (r, 0)),
        ),
        compiler_params=pltpu.CompilerParams(
            dimension_semantics=("parallel",),
            vmem_limit_bytes=_VMEM_LIMIT,
        ),
        cost_estimate=cost,
    )(ab, x2d, z2d)

    out = out2d.reshape(-1)
    if pad:
        out = out[:n]
    return out.reshape(orig_shape)


def log_exp_eps_pallas(x):
    """Elementwise log(exp(x) + eps), fused in one HBM pass."""
    orig_shape = x.shape
    n = int(np.prod(orig_shape))
    lane, rows, block_rows, grid_rows, pad = _tile_plan(n)

    xf = x.reshape(-1)
    if pad:
        xf = jnp.pad(xf, (0, pad))
    x2d = xf.reshape(rows, lane)

    total = rows * lane
    cost = pl.CostEstimate(
        flops=2 * total,
        transcendentals=2 * total,
        bytes_accessed=total * (x2d.dtype.itemsize + 4),
    )

    out2d = pl.pallas_call(
        _log_exp_eps_kernel,
        out_shape=jax.ShapeDtypeStruct((rows, lane), jnp.float32),
        grid_spec=pltpu.PrefetchScalarGridSpec(
            num_scalar_prefetch=0,
            grid=(grid_rows,),
            in_specs=[pl.BlockSpec((block_rows, lane), lambda r: (r, 0))],
            out_specs=pl.BlockSpec((block_rows, lane), lambda r: (r, 0)),
        ),
        compiler_params=pltpu.CompilerParams(
            dimension_semantics=("parallel",),
            vmem_limit_bytes=_VMEM_LIMIT,
        ),
        cost_estimate=cost,
    )(x2d)

    out = out2d.reshape(-1)
    if pad:
        out = out[:n]
    return out.reshape(orig_shape)


# --------------------------------------------------------------------------
# Module port
# --------------------------------------------------------------------------

class MixupPallas:
    """JAX/Pallas port of the PyTorch `Mixup` module.

    Args mirror the reference: ratio (alpha), n_memory (FIFO size),
    log_mixup_exp (mix in exp space if True).
    """

    def __init__(self, ratio=0.4, n_memory=2000, log_mixup_exp=True, seed=0):
        self.ratio = ratio
        self.n = n_memory
        self.log_mixup_exp = log_mixup_exp
        self.memory_bank = []
        self._rng = np.random.RandomState(seed)  # deterministic host-side RNG
        self.last_alpha = None                   # recorded for verification
        self.last_start = None                   # recorded for verification

    def _log_mixup_exp(self, xa, xb, alpha):
        len_xa = xa.shape[2]
        len_xb = xb.shape[2]
        self.last_start = None
        if len_xa < len_xb:
            start = int(self._rng.randint(0, len_xb - len_xa))
            self.last_start = start
            return log_mixup_exp_pallas(xa, xb[:, :, start:start + len_xa], alpha)
        elif len_xa > len_xb:
            # TODO(synk): fully fuse this branch into a single pallas_call
            # (scalar-prefetched start + column mask); currently the mixed
            # slice and the passthrough region each go through one fused
            # Pallas pass, stitched together with an XLA slice-set.
            start = int(self._rng.randint(0, len_xa - len_xb))
            self.last_start = start
            mixed_slice = log_mixup_exp_pallas(
                xa[:, :, start:start + len_xb], xb, alpha)
            outer = log_exp_eps_pallas(xa)
            return outer.at[:, :, start:start + len_xb].set(mixed_slice)
        else:
            return log_mixup_exp_pallas(xa, xb, alpha)

    def __call__(self, x):
        alpha = self.ratio * self._rng.random_sample()
        self.last_alpha = alpha
        if self.memory_bank:
            z = self.memory_bank[self._rng.randint(len(self.memory_bank))]
            if self.log_mixup_exp:
                # Reference calls log_mixup_exp(x, z, 1.0 - alpha).
                mixed = self._log_mixup_exp(x, z, 1.0 - alpha)
            else:
                mixed = alpha * z + (1.0 - alpha) * x
        else:
            mixed = x
        self.memory_bank = (self.memory_bank + [x])[-self.n:]
        return jnp.asarray(mixed, dtype=jnp.float32)

    def __repr__(self):
        return (f"{self.__class__.__name__}(ratio={self.ratio},n={self.n}"
                f",log_mixup_exp={self.log_mixup_exp})")


if __name__ == "__main__":
    key = jax.random.PRNGKey(0)
    k1, k2, k3, k4, k5, k6 = jax.random.split(key, 6)
    B, F, T = 2, 64, 96  # small log-mel-spectrogram-like shape
    x1 = jax.random.normal(k1, (B, F, T), dtype=jnp.float32)
    x2 = jax.random.normal(k2, (B, F, T), dtype=jnp.float32)

    # ---- direct kernel correctness check (known alpha, single tile) -------
    a_fixed = 0.73
    out_direct = jax.block_until_ready(log_mixup_exp_pallas(x2, x1, a_fixed))
    ref_direct = jnp.log(a_fixed * jnp.exp(x2)
                         + (1.0 - a_fixed) * jnp.exp(x1) + _F32_EPS)
    np.testing.assert_allclose(np.asarray(out_direct), np.asarray(ref_direct),
                               rtol=1e-5, atol=1e-5)

    # ---- multi-step grid with a partial trailing block --------------------
    y1 = jax.random.normal(k3, (3, 64, 600), dtype=jnp.float32)
    y2 = jax.random.normal(k4, (3, 64, 600), dtype=jnp.float32)
    out_big = jax.block_until_ready(log_mixup_exp_pallas(y1, y2, 0.31))
    ref_big = jnp.log(0.31 * jnp.exp(y1) + 0.69 * jnp.exp(y2) + _F32_EPS)
    np.testing.assert_allclose(np.asarray(out_big), np.asarray(ref_big),
                               rtol=1e-5, atol=1e-5)

    # ---- length-mismatch branch (len_xa > len_xb) --------------------------
    xa_long = jax.random.normal(k5, (B, F, 128), dtype=jnp.float32)
    xb_short = jax.random.normal(k6, (B, F, 96), dtype=jnp.float32)
    mm = MixupPallas(seed=1)
    out_mm = jax.block_until_ready(mm._log_mixup_exp(xa_long, xb_short, 0.6))
    s = mm.last_start
    ref_mm = jnp.log(jnp.exp(xa_long) + _F32_EPS)
    ref_mid = jnp.log(0.6 * jnp.exp(xa_long[:, :, s:s + 96])
                      + 0.4 * jnp.exp(xb_short) + _F32_EPS)
    ref_mm = ref_mm.at[:, :, s:s + 96].set(ref_mid)
    np.testing.assert_allclose(np.asarray(out_mm), np.asarray(ref_mm),
                               rtol=1e-5, atol=1e-5)

    # ---- module-level check (alpha recorded by the module) -----------------
    mixup = MixupPallas(ratio=0.4, n_memory=2000, log_mixup_exp=True, seed=0)
    out1 = mixup(x1)   # memory bank empty -> passthrough
    out2 = mixup(x2)   # mixes x2 with x1 via the Pallas kernel
    out2 = jax.block_until_ready(out2)

    a_used = 1.0 - mixup.last_alpha   # actual alpha passed to log_mixup_exp
    ref2 = jnp.log(a_used * jnp.exp(x2)
                   + (1.0 - a_used) * jnp.exp(x1) + _F32_EPS)
    assert out1.shape == (B, F, T) and out2.shape == (B, F, T)
    assert out2.dtype == jnp.float32
    np.testing.assert_allclose(np.asarray(out2), np.asarray(ref2),
                               rtol=1e-5, atol=1e-5)

    print("KERNEL_OK")
</pallas_src>

<mosaic_0001>
module attributes {stable_mosaic.version = 11 : i64} {
  func.func @_log_mixup_exp_kernel(%arg0: i32, %arg1: memref<2xf32, #tpu.memory_space<smem>>, %arg2: memref<24x512xf32, #tpu.memory_space<vmem>>, %arg3: memref<24x512xf32, #tpu.memory_space<vmem>>, %arg4: memref<24x512xf32, #tpu.memory_space<vmem>>) attributes {dimension_semantics = [#tpu.dimension_semantics<parallel>], iteration_bounds = array<i64: 1>, scalar_prefetch = 1 : i64, scratch_operands = 0 : i64, tpu.core_type = #tpu.core_type<tc>, window_params = [{transform_indices = @transform_0, window_bounds = array<i64: 24, 512>}, {transform_indices = @transform_1, window_bounds = array<i64: 24, 512>}, {transform_indices = @transform_2, window_bounds = array<i64: 24, 512>}]} {
    %c0 = arith.constant 0 : index
    %0 = memref.load %arg1[%c0] : memref<2xf32, #tpu.memory_space<smem>>
    %c1 = arith.constant 1 : index
    %1 = memref.load %arg1[%c1] : memref<2xf32, #tpu.memory_space<smem>>
    %c0_0 = arith.constant 0 : index
    %c0_1 = arith.constant 0 : index
    %2 = vector.load %arg2[%c0_0, %c0_1] : memref<24x512xf32, #tpu.memory_space<vmem>>, vector<24x512xf32>
    %3 = math.exp %2 : vector<24x512xf32>
    %c0_2 = arith.constant 0 : index
    %c0_3 = arith.constant 0 : index
    %4 = vector.load %arg3[%c0_2, %c0_3] : memref<24x512xf32, #tpu.memory_space<vmem>>, vector<24x512xf32>
    %5 = math.exp %4 : vector<24x512xf32>
    %6 = vector.broadcast %0 : f32 to vector<24x512xf32>
    %7 = arith.mulf %6, %3 : vector<24x512xf32>
    %8 = vector.broadcast %1 : f32 to vector<24x512xf32>
    %9 = arith.mulf %8, %5 : vector<24x512xf32>
    %10 = arith.addf %7, %9 : vector<24x512xf32>
    %cst = arith.constant 1.1920929E-7 : f32
    %11 = vector.broadcast %cst : f32 to vector<24x512xf32>
    %12 = arith.addf %10, %11 : vector<24x512xf32>
    %13 = math.log %12 : vector<24x512xf32>
    %c0_4 = arith.constant 0 : index
    %c0_5 = arith.constant 0 : index
    %14 = vector.load %arg4[%c0_4, %c0_5] : memref<24x512xf32, #tpu.memory_space<vmem>>, vector<24x512xf32>
    tpu.vector_store %arg4[%c0_4, %c0_5], %13 {strides = array<i32>} : memref<24x512xf32, #tpu.memory_space<vmem>>, vector<24x512xf32>,
    return
  }
  func.func @transform_0(%arg0: i32, %arg1: memref<2xf32, #tpu.memory_space<smem>>) -> (i32, i32) {
    %c0_i32 = arith.constant 0 : i32
    %c0_i32_0 = arith.constant 0 : i32
    return %arg0, %c0_i32 : i32, i32
  }
  func.func @transform_1(%arg0: i32, %arg1: memref<2xf32, #tpu.memory_space<smem>>) -> (i32, i32) {
    %c0_i32 = arith.constant 0 : i32
    %c0_i32_0 = arith.constant 0 : i32
    return %arg0, %c0_i32 : i32, i32
  }
  func.func @transform_2(%arg0: i32, %arg1: memref<2xf32, #tpu.memory_space<smem>>) -> (i32, i32) {
    %c0_i32 = arith.constant 0 : i32
    %c0_i32_0 = arith.constant 0 : i32
    return %arg0, %c0_i32 : i32, i32
  }
}

</mosaic_0001>

<llo_original>
// kernel: tpu_custom_call.1
$region0: #{tpu_custom_call.1}
  #allocation0 [shape = 'u32[]', space=smem, size = 0x4, offset = 0x4, fixed_abs, tag = 'smem constant byte address 0x4 - core index']
  #allocation1 [shape = 'u32[144,128]{1,0:T(1,128)}', space=vmem, size = 0x12000, scoped, tag = 'internal scratch']
  #allocation2 [shape = 's32[1]{0}', space=sflag, size = 0x4, scoped, tag = 'scoped memory for tpu_custom_call.1']
  #allocation3 [shape = 'u8[512]{0}', space=smem, size = 0x200, scoped, tag = 'prefetched SMEM operand 0']
  %s0 = inlined_call_operand.hbm [shape: f32[2], index: 0, kind: input, shape index: {}]
  %s1 = inlined_call_operand.hbm [shape: f32[24,512], index: 1, kind: input, shape index: {}]
  %s2 = inlined_call_operand.hbm [shape: f32[24,512], index: 2, kind: input, shape index: {}]
  %s3 = inlined_call_operand.hbm [shape: f32[24,512], index: 3, kind: output, shape index: {}]
  %s4 = sld [smem:[#allocation0]]
  $region26: #{tpu_custom_call.1} parent=0
    _
  %s6 = ssub.s32 1, %s4
  %s7 = scalar_select 0, %s6, %s4
  %9 = dma.hbm_to_smem %s0, 16, [#allocation3], [#allocation2]
  %10 = dma.done [#allocation2], 16
  %11 = sfence
  $region1: #{tpu_custom_call.1} parent=0
    #allocation4 [shape = 'u8[49152]{0}', space=vmem, size = 0xc000, scoped, tag = 'input window, operand 1, single buffered']
    #allocation5 [shape = 's32[1]{0}', space=sflag, size = 0x4, scoped, tag = 'scoped memory for tpu_custom_call.1']
    #allocation6 [shape = 's32[1]{0}', space=sflag, size = 0x4, scoped, tag = 'scoped memory for tpu_custom_call.1']
    #allocation7 [shape = 'u8[49152]{0}', space=vmem, size = 0xc000, scoped, tag = 'input window, operand 2, single buffered']
    #allocation8 [shape = 's32[1]{0}', space=sflag, size = 0x4, scoped, tag = 'scoped memory for tpu_custom_call.1']
    #allocation9 [shape = 'u8[49152]{0}', space=vmem, size = 0xc000, scoped, tag = 'output window, operand 0, single buffered']
    %12 = vsyncpa [#allocation5], 0
    %13 = vsyncpa [#allocation8], 0
    %14 = vsyncpa [#allocation6], 0
    // Predicated region
    $region2: #{tpu_custom_call.1} parent=1 // pred_check
      _
    $region3: #{tpu_custom_call.1} parent=1 // pred_check_branch
      %16 = sbr.rel (0) target = $region5
    $region4: #{tpu_custom_call.1} parent=1 // pred_region
      %s18 = ssub.s32 1536, 1536
      %19 = vsyncadd [#allocation5], %s18
      %s20 = sshll.u32 [#allocation4], 4
      %s21 = int_to_ptr.vmem [resolvable:$true] %s20
      %26 = dma.hbm_to_vmem [thread:$0]  %s1, 1536, %s21, [#allocation5], 512, 512, 32
    $region5: #{tpu_custom_call.1} parent=1 // pred_fallthru
      _
    // Predicated region
    $region6: #{tpu_custom_call.1} parent=1 // pred_check
      _
    $region7: #{tpu_custom_call.1} parent=1 // pred_check_branch
      %28 = sbr.rel (0) target = $region9
    $region8: #{tpu_custom_call.1} parent=1 // pred_region
      %s30 = ssub.s32 1536, 1536
      %31 = vsyncadd [#allocation8], %s30
      %s32 = sshll.u32 [#allocation7], 4
      %s33 = int_to_ptr.vmem [resolvable:$true] %s32
      %38 = dma.hbm_to_vmem [thread:$0]  %s2, 1536, %s33, [#allocation8], 512, 512, 32
    $region9: #{tpu_custom_call.1} parent=1 // pred_fallthru
      _
    // Predicated region
    $region10: #{tpu_custom_call.1} parent=1 // pred_check
      _
    $region11: #{tpu_custom_call.1} parent=1 // pred_check_branch
      %40 = sbr.rel (0) target = $region13
    $region12: #{tpu_custom_call.1} parent=1 // pred_region
      %41 = dma.done [#allocation5], 1536
    $region13: #{tpu_custom_call.1} parent=1 // pred_fallthru
      _
    // Predicated region
    $region14: #{tpu_custom_call.1} parent=1 // pred_check
      _
    $region15: #{tpu_custom_call.1} parent=1 // pred_check_branch
      %43 = sbr.rel (0) target = $region17
    $region16: #{tpu_custom_call.1} parent=1 // pred_region
      %44 = dma.done [#allocation8], 1536
    $region17: #{tpu_custom_call.1} parent=1 // pred_fallthru
      _
    %s45 = sld [smem:[#allocation3]]
    %s46 = sld [smem:[#allocation3 + $0x1]]
    %v47 = vld [vmem:[#allocation4] sm:$0xff]
    %v48 = vld [vmem:[#allocation4 + $0x8] sm:$0xff]
    %v49 = vld [vmem:[#allocation4 + $0x10] sm:$0xff]
    %v50 = vld [vmem:[#allocation4 + $0x18] sm:$0xff]
    %v51 = vld [vmem:[#allocation4 + $0x20] sm:$0xff]
    %v52 = vld [vmem:[#allocation4 + $0x28] sm:$0xff]
    %v53 = vld [vmem:[#allocation4 + $0x30] sm:$0xff]
    %v54 = vld [vmem:[#allocation4 + $0x38] sm:$0xff]
    %v55 = vld [vmem:[#allocation4 + $0x40] sm:$0xff]
    %v56 = vld [vmem:[#allocation4 + $0x48] sm:$0xff]
    %v57 = vld [vmem:[#allocation4 + $0x50] sm:$0xff]
    %v58 = vld [vmem:[#allocation4 + $0x58] sm:$0xff]
    %v59 = vmul.f32 %v47, 1.442695
    %v60 = vpow.pop %v59
    %v61 = vmul.f32 %v48, 1.442695
    %v62 = vpow.pop %v61
    %v63 = vmul.f32 %v49, 1.442695
    %v64 = vpow.pop %v63
    %v65 = vmul.f32 %v50, 1.442695
    %v66 = vpow.pop %v65
    %v67 = vmul.f32 %v51, 1.442695
    %v68 = vpow.pop %v67
    %v69 = vmul.f32 %v52, 1.442695
    %v70 = vpow.pop %v69
    %v71 = vmul.f32 %v53, 1.442695
    %v72 = vpow.pop %v71
    %v73 = vmul.f32 %v54, 1.442695
    %v74 = vpow.pop %v73
    %v75 = vmul.f32 %v55, 1.442695
    %v76 = vpow.pop %v75
    %v77 = vmul.f32 %v56, 1.442695
    %v78 = vpow.pop %v77
    %v79 = vmul.f32 %v57, 1.442695
    %v80 = vpow.pop %v79
    %v81 = vmul.f32 %v58, 1.442695
    %v82 = vpow.pop %v81
    %v83 = vld [vmem:[#allocation7] sm:$0xff]
    %v84 = vld [vmem:[#allocation7 + $0x8] sm:$0xff]
    %v85 = vld [vmem:[#allocation7 + $0x10] sm:$0xff]
    %v86 = vld [vmem:[#allocation7 + $0x18] sm:$0xff]
    %v87 = vld [vmem:[#allocation7 + $0x20] sm:$0xff]
    %v88 = vld [vmem:[#allocation7 + $0x28] sm:$0xff]
    %v89 = vld [vmem:[#allocation7 + $0x30] sm:$0xff]
    %v90 = vld [vmem:[#allocation7 + $0x38] sm:$0xff]
    %v91 = vld [vmem:[#allocation7 + $0x40] sm:$0xff]
    %v92 = vld [vmem:[#allocation7 + $0x48] sm:$0xff]
    %v93 = vld [vmem:[#allocation7 + $0x50] sm:$0xff]
    %v94 = vld [vmem:[#allocation7 + $0x58] sm:$0xff]
    %v95 = vmul.f32 %v83, 1.442695
    %v96 = vpow.pop %v95
    %v97 = vmul.f32 %v84, 1.442695
    %v98 = vpow.pop %v97
    %v99 = vmul.f32 %v85, 1.442695
    %v100 = vpow.pop %v99
    %v101 = vmul.f32 %v86, 1.442695
    %v102 = vpow.pop %v101
    %v103 = vmul.f32 %v87, 1.442695
    %v104 = vpow.pop %v103
    %v105 = vmul.f32 %v88, 1.442695
    %v106 = vpow.pop %v105
    %v107 = vmul.f32 %v89, 1.442695
    %v108 = vpow.pop %v107
    %v109 = vmul.f32 %v90, 1.442695
    %v110 = vpow.pop %v109
    %v111 = vmul.f32 %v91, 1.442695
    %v112 = vpow.pop %v111
    %v113 = vmul.f32 %v92, 1.442695
    %v114 = vpow.pop %v113
    %v115 = vmul.f32 %v93, 1.442695
    %v116 = vpow.pop %v115
    %v117 = vmul.f32 %v94, 1.442695
    %v118 = vpow.pop %v117
    %v119 = vstv %s45
    %v120 = vmul.f32 %v119, %v60
    %v121 = vmul.f32 %v119, %v62
    %v122 = vmul.f32 %v119, %v64
    %v123 = vmul.f32 %v119, %v66
    %v124 = vmul.f32 %v119, %v68
    %v125 = vmul.f32 %v119, %v70
    %v126 = vmul.f32 %v119, %v72
    %v127 = vmul.f32 %v119, %v74
    %v128 = vmul.f32 %v119, %v76
    %v129 = vmul.f32 %v119, %v78
    %v130 = vmul.f32 %v119, %v80
    %v131 = vmul.f32 %v119, %v82
    %v132 = vstv %s46
    %v133 = vmul.f32 %v132, %v96
    %v134 = vmul.f32 %v132, %v98
    %v135 = vmul.f32 %v132, %v100
    %v136 = vmul.f32 %v132, %v102
    %v137 = vmul.f32 %v132, %v104
    %v138 = vmul.f32 %v132, %v106
    %v139 = vmul.f32 %v132, %v108
    %v140 = vmul.f32 %v132, %v110
    %v141 = vmul.f32 %v132, %v112
    %v142 = vmul.f32 %v132, %v114
    %v143 = vmul.f32 %v132, %v116
    %v144 = vmul.f32 %v132, %v118
    %v145 = vadd.f32 %v120, %v133
    %v146 = vadd.f32 %v121, %v134
    %v147 = vadd.f32 %v122, %v135
    %v148 = vadd.f32 %v123, %v136
    %v149 = vadd.f32 %v124, %v137
    %v150 = vadd.f32 %v125, %v138
    %v151 = vadd.f32 %v126, %v139
    %v152 = vadd.f32 %v127, %v140
    %v153 = vadd.f32 %v128, %v141
    %v154 = vadd.f32 %v129, %v142
    %v155 = vadd.f32 %v130, %v143
    %v156 = vadd.f32 %v131, %v144
    %v157 = vadd.f32 %v145, 1.1920929e-07
    %v158 = vadd.f32 %v146, 1.1920929e-07
    %v159 = vadd.f32 %v147, 1.1920929e-07
    %v160 = vadd.f32 %v148, 1.1920929e-07
    %v161 = vadd.f32 %v149, 1.1920929e-07
    %v162 = vadd.f32 %v150, 1.1920929e-07
    %v163 = vadd.f32 %v151, 1.1920929e-07
    %v164 = vadd.f32 %v152, 1.1920929e-07
    %v165 = vadd.f32 %v153, 1.1920929e-07
    %v166 = vadd.f32 %v154, 1.1920929e-07
    %v167 = vadd.f32 %v155, 1.1920929e-07
    %v168 = vadd.f32 %v156, 1.1920929e-07
    %v169 = vlog2.pop %v157
    %v170 = vmul.f32 %v169, 0.6931472
    %v171 = vlog2.pop %v158
    %v172 = vmul.f32 %v171, 0.6931472
    %v173 = vlog2.pop %v159
    %v174 = vmul.f32 %v173, 0.6931472
    %v175 = vlog2.pop %v160
    %v176 = vmul.f32 %v175, 0.6931472
    %v177 = vlog2.pop %v161
    %v178 = vmul.f32 %v177, 0.6931472
    %v179 = vlog2.pop %v162
    %v180 = vmul.f32 %v179, 0.6931472
    %v181 = vlog2.pop %v163
    %v182 = vmul.f32 %v181, 0.6931472
    %v183 = vlog2.pop %v164
    %v184 = vmul.f32 %v183, 0.6931472
    %v185 = vlog2.pop %v165
    %v186 = vmul.f32 %v185, 0.6931472
    %v187 = vlog2.pop %v166
    %v188 = vmul.f32 %v187, 0.6931472
    %v189 = vlog2.pop %v167
    %v190 = vmul.f32 %v189, 0.6931472
    %v191 = vlog2.pop %v168
    %v192 = vmul.f32 %v191, 0.6931472
    %193 = vst [vmem:[#allocation9] sm:$0xff] %v170
    %194 = vst [vmem:[#allocation9 + $0x8] sm:$0xff] %v172
    %195 = vst [vmem:[#allocation9 + $0x10] sm:$0xff] %v174
    %196 = vst [vmem:[#allocation9 + $0x18] sm:$0xff] %v176
    %197 = vst [vmem:[#allocation9 + $0x20] sm:$0xff] %v178
    %198 = vst [vmem:[#allocation9 + $0x28] sm:$0xff] %v180
    %199 = vst [vmem:[#allocation9 + $0x30] sm:$0xff] %v182
    %200 = vst [vmem:[#allocation9 + $0x38] sm:$0xff] %v184
    %201 = vst [vmem:[#allocation9 + $0x40] sm:$0xff] %v186
    %202 = vst [vmem:[#allocation9 + $0x48] sm:$0xff] %v188
    %203 = vst [vmem:[#allocation9 + $0x50] sm:$0xff] %v190
    %204 = vst [vmem:[#allocation9 + $0x58] sm:$0xff] %v192
    // Predicated region
    $region18: #{tpu_custom_call.1} parent=1 // pred_check
      _
    $region19: #{tpu_custom_call.1} parent=1 // pred_check_branch
      %206 = sbr.rel (0) target = $region21
    $region20: #{tpu_custom_call.1} parent=1 // pred_region
      %s208 = ssub.s32 1536, 1536
      %209 = vsyncadd [#allocation6], %s208
      %s210 = sshll.u32 [#allocation9], 4
      %s211 = int_to_ptr.vmem [resolvable:$true] %s210
      %216 = dma.vmem_to_hbm [thread:$0]  %s211, 1536, %s3, [#allocation6], 512, 512, 32
    $region21: #{tpu_custom_call.1} parent=1 // pred_fallthru
      _
    // Predicated region
    $region22: #{tpu_custom_call.1} parent=1 // pred_check
      _
    $region23: #{tpu_custom_call.1} parent=1 // pred_check_branch
      %218 = sbr.rel (0) target = $region25
    $region24: #{tpu_custom_call.1} parent=1 // pred_region
      %219 = dma.done [#allocation6], 1536
    $region25: #{tpu_custom_call.1} parent=1 // pred_fallthru
      _
    %220 = vsyncpa [#allocation5], 1
    %221 = vsyncpa [#allocation8], 1
    %222 = vsyncpa [#allocation6], 1

</llo_original>
